<compile_context>
chip_gen: v5e
topology: v5e:2x2
jax: 0.10.0
libtpu: 0.0.40
codegen_flags: <defaults>
</compile_context>

<pallas_src>
import functools

import jax
import jax.numpy as jnp
from jax.experimental import pallas as pl
from jax.experimental.pallas import tpu as pltpu


_LANE_TILE_CANDIDATES = (4096, 2048, 1024, 512, 256, 128)
_BLOCK_BYTE_BUDGET = 2 * 1024 * 1024  # per-buffer cap; ~8 MiB with double buffering


def _crop_tiled_kernel(x_ref, o_ref, *, copy_len, lane_tile):
    """One output lane-tile per grid step: copy the window, zero the padding."""
    j = pl.program_id(0)
    n_full = copy_len // lane_tile  # static: tiles that lie 100% inside the copy window

    @pl.when(j < n_full)
    def _copy_tile():
        # Hot path: straight tile copy; each element stored exactly once.
        o_ref[...] = x_ref[...]

    @pl.when(j >= n_full)
    def _boundary_or_pad_tile():
        # Boundary tile (partly copy / partly zero) and pure zero-padding tiles.
        xv = x_ref[...]
        col = j * lane_tile + jax.lax.broadcasted_iota(jnp.int32, o_ref.shape, 1)
        o_ref[...] = jnp.where(col < copy_len, xv, jnp.zeros_like(xv))


def _crop_tiled(src, size, start, copy_len, lane_tile):
    channels, _ = src.shape
    n_out_tiles = pl.cdiv(size, lane_tile)
    n_copy_tiles = pl.cdiv(copy_len, lane_tile)  # >= 1 (copy_len > 0 here)
    start_block = start // lane_tile             # start % lane_tile == 0 guaranteed

    def in_index_map(j):
        # Fold `start` into the DMA; clamp padding tiles onto the last copy
        # block so we never index past the input (repeat index => no re-fetch).
        return (0, start_block + jnp.minimum(j, n_copy_tiles - 1))

    kernel = functools.partial(_crop_tiled_kernel, copy_len=copy_len, lane_tile=lane_tile)
    return pl.pallas_call(
        kernel,
        out_shape=jax.ShapeDtypeStruct((channels, size), src.dtype),
        grid=(n_out_tiles,),
        in_specs=[pl.BlockSpec((channels, lane_tile), in_index_map)],
        out_specs=pl.BlockSpec((channels, lane_tile), lambda j: (0, j)),
        compiler_params=pltpu.CompilerParams(dimension_semantics=("parallel",)),
    )(src)


def _crop_small_kernel(x_ref, o_ref):
    channels, copy_len = x_ref.shape
    size = o_ref.shape[1]
    if copy_len == size:
        o_ref[...] = x_ref[...]
    else:
        # Single write per element: data into the head, zeros into the tail.
        o_ref[:, :copy_len] = x_ref[...]
        o_ref[:, copy_len:] = jnp.zeros((channels, size - copy_len), o_ref.dtype)


def _crop_small(window, size):
    channels, copy_len = window.shape
    return pl.pallas_call(
        _crop_small_kernel,
        out_shape=jax.ShapeDtypeStruct((channels, size), window.dtype),
        in_specs=[pl.BlockSpec((channels, copy_len), lambda: (0, 0))],
        out_specs=pl.BlockSpec((channels, size), lambda: (0, 0)),
    )(window)


def crop(x: jax.Array, size: int, start: int = 0) -> jax.Array:
    """JAX/Pallas equivalent of Crop(size, start).forward(x)."""
    channels, length = x.shape
    copy_len = max(0, min(size, length - start))

    if copy_len == 0:
        # Everything is padding; no input data is needed at all.
        return jnp.zeros((channels, size), dtype=x.dtype)

    itemsize = jnp.dtype(x.dtype).itemsize
    candidates = [t for t in _LANE_TILE_CANDIDATES
                  if t <= size and channels * t * itemsize <= _BLOCK_BYTE_BUDGET]

    # Preferred path: `start` tile-aligned -> fold the offset into the DMA.
    for t in candidates:
        if start % t == 0 and t <= length:
            return _crop_tiled(x, size, start, copy_len, t)

    # Unaligned `start`: materialize the window once (extra round trip over the
    # window only, never over the full input), then run the tiled kernel.
    # TODO(synk): an Element-indexed BlockSpec / manual DMA could absorb the
    # unaligned lane offset without this extra XLA copy.
    for t in candidates:
        if t <= copy_len:
            window = jax.lax.slice(x, (0, start), (channels, start + copy_len))
            return _crop_tiled(window, size, 0, copy_len, t)

    # Small outputs (or tiny copy windows): single-block kernel on the window.
    window = jax.lax.slice(x, (0, start), (channels, start + copy_len))
    return _crop_small(window, size)


def _crop_ref(x: jax.Array, size: int, start: int = 0) -> jax.Array:
    """Pure-JAX reference mirroring the PyTorch forward."""
    x = x[:, start:]
    channels, length = x.shape
    if length < size:
        pad = jnp.zeros((channels, size - length), dtype=x.dtype)
        return jnp.concatenate([x, pad], axis=1)
    return x[:, :size]


if __name__ == "__main__":
    key = jax.random.PRNGKey(0)
    k1, k2, k3 = jax.random.split(key, 3)

    x_small = jax.random.normal(k1, (2, 512), dtype=jnp.float32)
    x_big = jax.random.normal(k2, (2, 8192), dtype=jnp.float32)
    x_mono = jax.random.normal(k3, (1, 1000), dtype=jnp.float32)

    def check(x, size, start):
        out = crop(x, size, start)
        jax.block_until_ready(out)
        ref = _crop_ref(x, size, start)
        assert out.shape == (x.shape[0], size), f"bad shape for size={size} start={start}"
        assert jnp.allclose(out, ref), f"mismatch for size={size} start={start}"

    # Small-output path: truncate with unaligned start, and right-pad.
    check(x_small, size=100, start=7)
    check(x_small, size=600, start=480)

    # Tiled path, `start` folded into the DMA index_map (aligned): truncate.
    check(x_big, size=2000, start=256)
    # Tiled path, unaligned start -> materialized window, with zero padding.
    check(x_big, size=3000, start=6000)
    # Tiled path, start=0, output longer than input -> pure-padding tiles.
    check(x_mono, size=4096, start=0)

    print("KERNEL_OK")
</pallas_src>

<mosaic_0001>
module attributes {stable_mosaic.version = 11 : i64} {
  func.func @_crop_small_kernel(%arg0: memref<2x100xf32, #tpu.memory_space<vmem>>, %arg1: memref<2x100xf32, #tpu.memory_space<vmem>>) attributes {dimension_semantics = [], scalar_prefetch = 0 : i64, scratch_operands = 0 : i64, tpu.core_type = #tpu.core_type<tc>} {
    %c0 = arith.constant 0 : index
    %c0_0 = arith.constant 0 : index
    %0 = vector.load %arg0[%c0, %c0_0] : memref<2x100xf32, #tpu.memory_space<vmem>>, vector<2x100xf32>
    %c0_1 = arith.constant 0 : index
    %c0_2 = arith.constant 0 : index
    %1 = vector.load %arg1[%c0_1, %c0_2] : memref<2x100xf32, #tpu.memory_space<vmem>>, vector<2x100xf32>
    tpu.vector_store %arg1[%c0_1, %c0_2], %0 {strides = array<i32>} : memref<2x100xf32, #tpu.memory_space<vmem>>, vector<2x100xf32>,
    return
  }
}

</mosaic_0001>

<llo_original>
// kernel: tpu_custom_call.1
$region0: #{tpu_custom_call.1}
  #allocation0 [shape = 'u32[]', space=smem, size = 0x4, offset = 0x4, fixed_abs, tag = 'smem constant byte address 0x4 - core index']
  #allocation1 [shape = 'u32[72,128]{1,0:T(1,128)}', space=vmem, size = 0x9000, scoped, tag = 'internal scratch']
  %s0 = inlined_call_operand.hbm [shape: f32[2,100], index: 0, kind: input, shape index: {}]
  %s1 = inlined_call_operand.hbm [shape: f32[2,100], index: 1, kind: output, shape index: {}]
  %s2 = sld [smem:[#allocation0]]
  $region18: #{tpu_custom_call.1} parent=0
    _
  %s4 = ssub.s32 1, %s2
  %s5 = scalar_select 0, %s4, %s2
  $region1: #{tpu_custom_call.1} parent=0
    #allocation2 [shape = 'u8[1024]{0}', space=vmem, size = 0x400, scoped, tag = 'input window, operand 0, single buffered']
    #allocation3 [shape = 's32[1]{0}', space=sflag, size = 0x4, scoped, tag = 'scoped memory for tpu_custom_call.1']
    #allocation4 [shape = 's32[1]{0}', space=sflag, size = 0x4, scoped, tag = 'scoped memory for tpu_custom_call.1']
    #allocation5 [shape = 'u8[1024]{0}', space=vmem, size = 0x400, scoped, tag = 'output window, operand 0, single buffered']
    %6 = vsyncpa [#allocation3], 0
    %7 = vsyncpa [#allocation4], 0
    // Predicated region
    $region2: #{tpu_custom_call.1} parent=1 // pred_check
      _
    $region3: #{tpu_custom_call.1} parent=1 // pred_check_branch
      %9 = sbr.rel (0) target = $region5
    $region4: #{tpu_custom_call.1} parent=1 // pred_region
      %11 = vsyncadd [#allocation3], 0
      %s13 = sshll.u32 %s0, 4
      %s14 = int_to_ptr.hbm [resolvable:$true] %s13
      %s15 = sshll.u32 [#allocation2], 4
      %s16 = int_to_ptr.vmem [resolvable:$true] %s15
      %18 = dma.hbm_to_vmem [thread:$0]  %s14, 32, %s16, [#allocation3]
    $region5: #{tpu_custom_call.1} parent=1 // pred_fallthru
      _
    // Predicated region
    $region6: #{tpu_custom_call.1} parent=1 // pred_check
      _
    $region7: #{tpu_custom_call.1} parent=1 // pred_check_branch
      %20 = sbr.rel (0) target = $region9
    $region8: #{tpu_custom_call.1} parent=1 // pred_region
      %22 = dma.done [#allocation3], 32
    $region9: #{tpu_custom_call.1} parent=1 // pred_fallthru
      _
    %v23 = vld [vmem:[#allocation2] sm:$0x3]
    %vm24 = vcmask 812032
    %25 = vst.msk [vmem:[#allocation5] sm:$0x3] %vm24, %v23
    // Predicated region
    $region10: #{tpu_custom_call.1} parent=1 // pred_check
      _
    $region11: #{tpu_custom_call.1} parent=1 // pred_check_branch
      %27 = sbr.rel (0) target = $region13
    $region12: #{tpu_custom_call.1} parent=1 // pred_region
      %29 = vsyncadd [#allocation4], 0
      %s31 = sshll.u32 [#allocation5], 4
      %s32 = int_to_ptr.vmem [resolvable:$true] %s31
      %s33 = sshll.u32 %s1, 4
      %s34 = int_to_ptr.hbm [resolvable:$true] %s33
      %36 = dma.vmem_to_hbm [thread:$0]  %s32, 32, %s34, [#allocation4]
    $region13: #{tpu_custom_call.1} parent=1 // pred_fallthru
      _
    // Predicated region
    $region14: #{tpu_custom_call.1} parent=1 // pred_check
      _
    $region15: #{tpu_custom_call.1} parent=1 // pred_check_branch
      %38 = sbr.rel (0) target = $region17
    $region16: #{tpu_custom_call.1} parent=1 // pred_region
      %40 = dma.done [#allocation4], 32
    $region17: #{tpu_custom_call.1} parent=1 // pred_fallthru
      _
    %41 = vsyncpa [#allocation3], 1
    %42 = vsyncpa [#allocation4], 1

</llo_original>
